<compile_context>
chip_gen: v5e
topology: v5e:2x2
jax: 0.10.0
libtpu: 0.0.40
codegen_flags: <defaults>
</compile_context>

<pallas_src>
import functools
import math

import jax
import jax.numpy as jnp
from jax.experimental import pallas as pl
from jax.experimental.pallas import tpu as pltpu


# ---------------------------------------------------------------------------
# Per-chip VMEM budget & tile-size selection
# ---------------------------------------------------------------------------
def _vmem_budget_bytes():
    try:
        cap = int(pltpu.get_tpu_info().vmem_capacity_bytes)
    except Exception:
        cap = 128 * 1024 * 1024
    # leave headroom for Mosaic internal scratch; cap at ~100 MiB on 128 MiB parts,
    # ~56 MiB on v7x's 64 MiB parts.
    return max(32 * 1024 * 1024, min(cap - (8 << 20), 100 << 20))


def _pick_tile_l(L, Dp, B, budget):
    if L <= 128:
        return L
    for tl in (512, 384, 256, 128):
        if L % tl:
            continue
        need = (2 * Dp * tl * tl * 2      # double-buffered lag-Toeplitz tile (bf16)
                + 2 * Dp * B * tl * 2     # double-buffered u tile (bf16)
                + Dp * B * tl * 4         # f32 accumulator
                + 4 * Dp * Dp * 2         # GLU weights
                + (4 << 20))              # headroom
        if need <= budget:
            return tl
    return 128 if L % 128 == 0 else L


def _round_up(v, m):
    return ((v + m - 1) // m) * m


# ---------------------------------------------------------------------------
# Kernel A: fc1 (Linear + ReLU) + LayerNorm, writes channels-first (Dp, B, L).
# Grid = (L-tile,), all batch rows handled inside (B is small).
# ---------------------------------------------------------------------------
def embed_ln_kernel(x_ref, w1_ref, b1_ref, g_ref, beta_ref, o_ref, *, d_model, n_batch):
    inv_d = 1.0 / d_model
    rows = []
    for b in range(n_batch):                                  # B is small & static
        xb = x_ref[b].astype(jnp.bfloat16)                    # (In, TL)
        h = jnp.dot(w1_ref[...], xb,
                    preferred_element_type=jnp.float32) + b1_ref[...]   # (Dp, TL)
        h = jnp.maximum(h, 0.0)                               # ReLU; padded rows stay 0
        mu = jnp.sum(h, axis=0, keepdims=True) * inv_d        # stats over real d_model
        var = jnp.maximum(jnp.sum(h * h, axis=0, keepdims=True) * inv_d - mu * mu, 0.0)
        u = (h - mu) * jax.lax.rsqrt(var + 1e-5) * g_ref[...] + beta_ref[...]
        rows.append(u.astype(o_ref.dtype)[:, None, :])        # (Dp, 1, TL)
    o_ref[...] = jnp.concatenate(rows, axis=1)                # one unmasked full store


# ---------------------------------------------------------------------------
# Kernel B: S4D causal Toeplitz conv (MXU, h-batched) + GELU + GLU + max over L-tile.
# Grid = (output L-tile i [parallel], input m-tile j [arbitrary, reduction, last]).
# Causally-dead (j > i) steps are DMA-free (clamped index maps) and compute-free.
# ---------------------------------------------------------------------------
def s4_conv_glu_pool_kernel(u_ref, t_ref, wa_ref, wb_ref, ba_ref, bb_ref,
                            out_ref, acc_ref, *, n_batch, tile_l, u_resident):
    i = pl.program_id(0)
    j = pl.program_id(1)

    @pl.when(j == 0)
    def _init():
        acc_ref[...] = jnp.zeros_like(acc_ref)

    @pl.when(j <= i)  # strictly-upper (j > i) Toeplitz blocks are identically zero
    def _accumulate():
        if u_resident:
            jj = jnp.minimum(j, i)
            start = pl.multiple_of(jj * tile_l, tile_l)
            u_blk = u_ref[:, :, pl.ds(start, tile_l)]          # (Dp, B, TL) bf16
        else:
            u_blk = u_ref[...]
        # (Dp, B, TLm) x (Dp, TLm, TL) -> (Dp, B, TL) f32, h-batched on the MXU.
        acc_ref[...] += jax.lax.dot_general(
            u_blk, t_ref[0],
            dimension_numbers=(((2,), (1,)), ((0,), (0,))),
            preferred_element_type=jnp.float32)

    @pl.when(j == i)  # all contributing input tiles (j <= i) have been accumulated
    def _finalize():
        y = acc_ref[...]                                       # (Dp, B, TL) f32
        c = math.sqrt(2.0 / math.pi)
        # tanh-approximate GELU over the whole slab.  TODO(synk): exact-erf nn.GELU.
        g = 0.5 * y * (1.0 + jnp.tanh(c * (y + 0.044715 * y * y * y)))
        # lane-concat batches -> one pair of GLU dots (single MXU weight push each).
        gb = jnp.concatenate([g[:, b, :] for b in range(n_batch)],
                             axis=1).astype(jnp.bfloat16)      # (Dp, B*TL)
        za = jnp.dot(wa_ref[...], gb, preferred_element_type=jnp.float32) + ba_ref[...]
        zb = jnp.dot(wb_ref[...], gb, preferred_element_type=jnp.float32) + bb_ref[...]
        glu = za * jax.nn.sigmoid(zb)                          # (Dp, B*TL)
        cols = [jnp.max(glu[:, b * tile_l:(b + 1) * tile_l], axis=1, keepdims=True)
                for b in range(n_batch)]
        out_ref[0] = jnp.concatenate(cols, axis=1)             # per-tile max, (Dp, B)


# ---------------------------------------------------------------------------
# Kernel C: combine per-tile maxima, fc2 + LeakyReLU, fc3, argmax over batch.
# ---------------------------------------------------------------------------
def head_kernel(p_ref, w2_ref, b2_ref, w3_ref, b3_ref, logits_ref, yhat_ref):
    pooled = jnp.max(p_ref[...], axis=0)                       # (Dp, B)
    h2 = jnp.dot(w2_ref[...], pooled.astype(jnp.bfloat16),
                 preferred_element_type=jnp.float32) + b2_ref[...]      # (512, B)
    h2 = jnp.where(h2 >= 0, h2, 0.01 * h2)                     # LeakyReLU(0.01)
    logits = jnp.dot(w3_ref[...], h2.astype(jnp.bfloat16),
                     preferred_element_type=jnp.float32) + b3_ref[...]  # (Cp, B)
    logits_ref[...] = logits
    # Y_hat = argmax over batch (torch: argmax(logits, dim=0)); first max wins.
    nb = logits.shape[1]
    mx = jnp.max(logits, axis=1, keepdims=True)
    ids = jax.lax.broadcasted_iota(jnp.int32, logits.shape, 1)
    yhat_ref[...] = jnp.min(jnp.where(logits == mx, ids, nb), axis=1,
                            keepdims=True).astype(jnp.int32)   # (Cp, 1)


# ---------------------------------------------------------------------------
# Lag-indexed causal Toeplitz tiles (plain JAX; hoist to setup time in production).
# T[d, h, m, l] = Keff[h, d*TL + l - m] if (d*TL + l - m) >= 0 else 0.
# ---------------------------------------------------------------------------
def _build_lag_toeplitz(keff, tile_l, num_lt):
    Dp, L = keff.shape
    m_i = jnp.arange(tile_l)[:, None]
    l_i = jnp.arange(tile_l)[None, :]
    base = l_i - m_i                                            # (TL, TL)
    lags = jnp.arange(num_lt)[:, None, None] * tile_l + base    # (num_lt, TL, TL)
    valid = lags >= 0
    idx = jnp.clip(lags, 0, L - 1)
    t = keff[:, idx]                                            # (Dp, num_lt, TL, TL)
    t = jnp.where(valid[None], t, 0.0)
    return jnp.transpose(t, (1, 0, 2, 3)).astype(jnp.bfloat16)  # contiguous per-lag slabs


# ---------------------------------------------------------------------------
# Wrapper
# ---------------------------------------------------------------------------
def s4model_forward(x, params, *, model_dim, n_classes, tile_l=None):
    B, L, In = x.shape
    Dp = params["w1_t"].shape[0]
    Cp = params["w3_t"].shape[0]

    budget = _vmem_budget_bytes()
    TL = tile_l if tile_l is not None else _pick_tile_l(L, Dp, B, budget)
    if L % TL != 0:
        TL = L
    num_lt = L // TL

    # Small input-layout transpose only (In << Dp); no HBM padding of x.
    x_t = jnp.transpose(x, (0, 2, 1))                           # (B, In, L)

    # ---- Kernel A: fc1 + ReLU + LayerNorm, channels-first output ----
    u_cf = pl.pallas_call(
        functools.partial(embed_ln_kernel, d_model=model_dim, n_batch=B),
        out_shape=jax.ShapeDtypeStruct((Dp, B, L), jnp.bfloat16),
        grid=(num_lt,),
        in_specs=[pl.BlockSpec((B, In, TL), lambda i: (0, 0, i)),
                  pl.BlockSpec((Dp, In), lambda i: (0, 0)),
                  pl.BlockSpec((Dp, 1), lambda i: (0, 0)),
                  pl.BlockSpec((Dp, 1), lambda i: (0, 0)),
                  pl.BlockSpec((Dp, 1), lambda i: (0, 0))],
        out_specs=pl.BlockSpec((Dp, B, TL), lambda i: (0, 0, i)),
        compiler_params=pltpu.CompilerParams(
            dimension_semantics=("parallel",),
            vmem_limit_bytes=budget),
    )(x_t, params["w1_t"], params["b1"], params["ln_g"], params["ln_b"])

    # Lag-indexed Toeplitz (num_lt, Dp, TL, TL); built once from Keff (Dp, L).
    tconv = _build_lag_toeplitz(params["keff"], TL, num_lt)

    # Keep u resident in VMEM when it fits; otherwise stream clamped tiles.
    u_resident = Dp * B * L * 2 <= min(budget // 4, 16 * 1024 * 1024)
    if u_resident:
        u_spec = pl.BlockSpec((Dp, B, L), lambda i, j: (0, 0, 0))
    else:
        u_spec = pl.BlockSpec((Dp, B, TL), lambda i, j: (0, 0, jnp.minimum(j, i)))

    # ---- Kernel B: S4D conv + GELU + GLU + per-tile max over L ----
    lower_blocks = num_lt * (num_lt + 1) // 2
    flops = Dp * B * L * L + 4 * Dp * Dp * B * L
    transcendentals = 2 * Dp * B * L
    bytes_accessed = (lower_blocks * Dp * TL * TL * 2
                      + (Dp * B * L * 2 if u_resident else lower_blocks * Dp * B * TL * 2)
                      + 2 * Dp * Dp * 2 + num_lt * Dp * B * 4)
    pooled = pl.pallas_call(
        functools.partial(s4_conv_glu_pool_kernel,
                          n_batch=B, tile_l=TL, u_resident=u_resident),
        out_shape=jax.ShapeDtypeStruct((num_lt, Dp, B), jnp.float32),
        grid=(num_lt, num_lt),
        in_specs=[u_spec,
                  pl.BlockSpec((1, Dp, TL, TL),
                               lambda i, j: (jnp.maximum(i - j, 0), 0, 0, 0)),
                  pl.BlockSpec((Dp, Dp), lambda i, j: (0, 0)),
                  pl.BlockSpec((Dp, Dp), lambda i, j: (0, 0)),
                  pl.BlockSpec((Dp, 1), lambda i, j: (0, 0)),
                  pl.BlockSpec((Dp, 1), lambda i, j: (0, 0))],
        out_specs=pl.BlockSpec((1, Dp, B), lambda i, j: (i, 0, 0)),
        scratch_shapes=[pltpu.VMEM((Dp, B, TL), jnp.float32)],
        compiler_params=pltpu.CompilerParams(
            dimension_semantics=("parallel", "arbitrary"),
            vmem_limit_bytes=budget),
        cost_estimate=pl.CostEstimate(flops=flops,
                                      transcendentals=transcendentals,
                                      bytes_accessed=bytes_accessed),
    )(u_cf, tconv, params["wa_t"], params["wb_t"], params["ba"], params["bb"])

    # ---- Kernel C: head (tiny; whole-VMEM) ----
    vmem = pl.BlockSpec(memory_space=pltpu.MemorySpace.VMEM)
    logits_t, yhat = pl.pallas_call(
        head_kernel,
        out_shape=(jax.ShapeDtypeStruct((Cp, B), jnp.float32),
                   jax.ShapeDtypeStruct((Cp, 1), jnp.int32)),
        in_specs=[vmem] * 5,
        out_specs=(vmem, vmem),
    )(pooled, params["w2_t"], params["b2"], params["w3_t"], params["b3"])

    logits = jnp.transpose(logits_t)[:, :n_classes]             # (B, C)
    y_hat = yhat[:n_classes, 0]                                 # (C,)
    return {"logits": logits, "Y_hat": y_hat}


# ---------------------------------------------------------------------------
# Parameter construction (plain JAX; channels padded to 8-sublane multiples only)
# ---------------------------------------------------------------------------
def init_params(key, input_dim, model_dim, state_dim, n_classes, seq_len):
    H, N2, L = model_dim, state_dim // 2, seq_len
    Dp = _round_up(max(model_dim, 8), 8)
    Cp = _round_up(max(n_classes, 8), 8)
    ks = jax.random.split(key, 10)

    def linear(k, fan_in, fan_out):           # PyTorch (out, in) convention
        bound = 1.0 / math.sqrt(fan_in)
        kw, kb = jax.random.split(k)
        w = jax.random.uniform(kw, (fan_out, fan_in), jnp.float32, -bound, bound)
        b = jax.random.uniform(kb, (fan_out,), jnp.float32, -bound, bound)
        return w, b

    # fc1 + LayerNorm (padded channel rows get zero weight/gamma so they stay exactly 0)
    w1_oi, b1v = linear(ks[0], input_dim, model_dim)
    w1_t = jnp.zeros((Dp, input_dim), jnp.float32).at[:H].set(w1_oi)
    b1 = jnp.zeros((Dp, 1), jnp.float32).at[:H, 0].set(b1v)
    ln_g = jnp.zeros((Dp, 1), jnp.float32).at[:H, 0].set(1.0)
    ln_b = jnp.zeros((Dp, 1), jnp.float32)

    # S4DKernel parameters -> SSM convolution kernel K (H, L)
    log_dt = (jax.random.uniform(ks[1], (H,)) * (math.log(0.1) - math.log(0.001))
              + math.log(0.001))
    C_re = jax.random.normal(ks[2], (H, N2))
    C_im = jax.random.normal(ks[3], (H, N2))
    log_A_real = jnp.log(0.5 * jnp.ones((H, N2), jnp.float32))
    A_imag = math.pi * jnp.broadcast_to(jnp.arange(N2, dtype=jnp.float32), (H, N2))
    dt = jnp.exp(log_dt)
    Cc = (C_re + 1j * C_im).astype(jnp.complex64)
    A = (-jnp.exp(log_A_real) + 1j * A_imag).astype(jnp.complex64)
    dtA = A * dt[:, None].astype(jnp.complex64)
    Kpow = jnp.exp(dtA[:, :, None] * jnp.arange(L, dtype=jnp.float32))
    Cm = Cc * (jnp.exp(dtA) - 1.0) / A
    K = (2.0 * jnp.sum(Cm[:, :, None] * Kpow, axis=1)).real.astype(jnp.float32)  # (H, L)

    # Fold the S4D skip term D*u into the lag-0 coefficient.
    dskip = jax.random.normal(ks[4], (H,), jnp.float32)
    keff = jnp.zeros((Dp, L), jnp.float32).at[:H].set(K)
    keff = keff.at[:H, 0].add(dskip)

    # output_linear: Conv1d(H, 2H, 1) + GLU -> two (Dp, Dp) matrices
    bound = 1.0 / math.sqrt(H)
    wglu = jax.random.uniform(ks[5], (2 * H, H), jnp.float32, -bound, bound)
    bglu = jax.random.uniform(ks[6], (2 * H,), jnp.float32, -bound, bound)
    wa_t = jnp.zeros((Dp, Dp), jnp.float32).at[:H, :H].set(wglu[:H])
    wb_t = jnp.zeros((Dp, Dp), jnp.float32).at[:H, :H].set(wglu[H:])
    ba = jnp.zeros((Dp, 1), jnp.float32).at[:H, 0].set(bglu[:H])
    bb = jnp.zeros((Dp, 1), jnp.float32).at[:H, 0].set(bglu[H:])

    # fc2 / fc3 (stored (out, in))
    w2_oi, b2v = linear(ks[7], model_dim, 512)
    w3_oi, b3v = linear(ks[8], 512, n_classes)
    w2_t = jnp.zeros((512, Dp), jnp.float32).at[:, :H].set(w2_oi)
    b2 = jnp.zeros((512, 1), jnp.float32).at[:, 0].set(b2v)
    w3_t = jnp.zeros((Cp, 512), jnp.float32).at[:n_classes].set(w3_oi)
    b3 = jnp.zeros((Cp, 1), jnp.float32).at[:n_classes, 0].set(b3v)

    return dict(
        w1_t=w1_t.astype(jnp.bfloat16), b1=b1, ln_g=ln_g, ln_b=ln_b,
        keff=keff,
        wa_t=wa_t.astype(jnp.bfloat16), wb_t=wb_t.astype(jnp.bfloat16), ba=ba, bb=bb,
        w2_t=w2_t.astype(jnp.bfloat16), b2=b2,
        w3_t=w3_t.astype(jnp.bfloat16), b3=b3,
    )


if __name__ == "__main__":
    B, L = 2, 16
    input_dim, model_dim, state_dim, n_classes = 16, 32, 16, 4

    key = jax.random.PRNGKey(0)
    kx, kp = jax.random.split(key)
    x = jax.random.normal(kx, (B, L, input_dim), jnp.float32)  # (batch, seq, input_dim)
    params = init_params(kp, input_dim, model_dim, state_dim, n_classes, L)

    out = s4model_forward(x, params, model_dim=model_dim, n_classes=n_classes)
    jax.block_until_ready(out)
    assert out["logits"].shape == (B, n_classes)
    assert out["Y_hat"].shape == (n_classes,)
    print("KERNEL_OK")
</pallas_src>

<mosaic_0001>
module attributes {stable_mosaic.version = 11 : i64} {
  func.func @embed_ln_kernel(%arg0: i32, %arg1: memref<2x16x16xf32, #tpu.memory_space<vmem>>, %arg2: memref<32x16xbf16, #tpu.memory_space<vmem>>, %arg3: memref<32x1xf32, #tpu.memory_space<vmem>>, %arg4: memref<32x1xf32, #tpu.memory_space<vmem>>, %arg5: memref<32x1xf32, #tpu.memory_space<vmem>>, %arg6: memref<32x2x16xbf16, #tpu.memory_space<vmem>>) attributes {dimension_semantics = [#tpu.dimension_semantics<parallel>], iteration_bounds = array<i64: 1>, scalar_prefetch = 0 : i64, scratch_operands = 0 : i64, tpu.core_type = #tpu.core_type<tc>, window_params = [{transform_indices = @transform_0, window_bounds = array<i64: 2, 16, 16>}, {pipeline_mode = #tpu.pipeline_mode<synchronous>, transform_indices = @transform_1, window_bounds = array<i64: 32, 16>}, {pipeline_mode = #tpu.pipeline_mode<synchronous>, transform_indices = @transform_2, window_bounds = array<i64: 32, 1>}, {pipeline_mode = #tpu.pipeline_mode<synchronous>, transform_indices = @transform_3, window_bounds = array<i64: 32, 1>}, {pipeline_mode = #tpu.pipeline_mode<synchronous>, transform_indices = @transform_4, window_bounds = array<i64: 32, 1>}, {transform_indices = @transform_5, window_bounds = array<i64: 32, 2, 16>}]} {
    %c0 = arith.constant 0 : index
    %c0_0 = arith.constant 0 : index
    %c0_1 = arith.constant 0 : index
    %0 = vector.load %arg1[%c0, %c0_0, %c0_1] : memref<2x16x16xf32, #tpu.memory_space<vmem>>, vector<1x16x16xf32>
    %1 = vector.shape_cast %0 : vector<1x16x16xf32> to vector<16x16xf32>
    %2 = arith.truncf %1 : vector<16x16xf32> to vector<16x16xbf16>
    %c0_2 = arith.constant 0 : index
    %c0_3 = arith.constant 0 : index
    %3 = vector.load %arg2[%c0_2, %c0_3] : memref<32x16xbf16, #tpu.memory_space<vmem>>, vector<32x16xbf16>
    %cst = arith.constant dense<0.000000e+00> : vector<32x16xf32>
    %4 = tpu.matmul %3, %2, %cst {dimension_numbers = #tpu.dot_dimension_numbers<[1], [0], [0], [1], [0, 0, 1, 1], [], []>} : vector<32x16xbf16>, vector<16x16xbf16>, vector<32x16xf32> -> vector<32x16xf32>
    %c0_4 = arith.constant 0 : index
    %c0_5 = arith.constant 0 : index
    %5 = vector.load %arg3[%c0_4, %c0_5] : memref<32x1xf32, #tpu.memory_space<vmem>>, vector<32x1xf32>
    %6 = vector.broadcast %5 : vector<32x1xf32> to vector<32x16xf32>
    %7 = arith.addf %4, %6 : vector<32x16xf32>
    %cst_6 = arith.constant 0.000000e+00 : f32
    %8 = vector.broadcast %cst_6 : f32 to vector<32x16xf32>
    %9 = arith.maximumf %7, %8 : vector<32x16xf32>
    %cst_7 = arith.constant dense<0.000000e+00> : vector<16xf32>
    %10 = vector.multi_reduction <add>, %9, %cst_7 [0] : vector<32x16xf32> to vector<16xf32>
    %11 = vector.shape_cast %10 : vector<16xf32> to vector<1x16xf32>
    %cst_8 = arith.constant 3.125000e-02 : f32
    %12 = vector.broadcast %cst_8 : f32 to vector<1x16xf32>
    %13 = arith.mulf %11, %12 : vector<1x16xf32>
    %14 = arith.mulf %9, %9 : vector<32x16xf32>
    %cst_9 = arith.constant dense<0.000000e+00> : vector<16xf32>
    %15 = vector.multi_reduction <add>, %14, %cst_9 [0] : vector<32x16xf32> to vector<16xf32>
    %16 = vector.shape_cast %15 : vector<16xf32> to vector<1x16xf32>
    %cst_10 = arith.constant 3.125000e-02 : f32
    %17 = vector.broadcast %cst_10 : f32 to vector<1x16xf32>
    %18 = arith.mulf %16, %17 : vector<1x16xf32>
    %19 = arith.mulf %13, %13 : vector<1x16xf32>
    %20 = arith.subf %18, %19 : vector<1x16xf32>
    %cst_11 = arith.constant 0.000000e+00 : f32
    %21 = vector.broadcast %cst_11 : f32 to vector<1x16xf32>
    %22 = arith.maximumf %20, %21 : vector<1x16xf32>
    %23 = vector.broadcast %13 : vector<1x16xf32> to vector<32x16xf32>
    %24 = arith.subf %9, %23 : vector<32x16xf32>
    %cst_12 = arith.constant 9.99999974E-6 : f32
    %25 = vector.broadcast %cst_12 : f32 to vector<1x16xf32>
    %26 = arith.addf %22, %25 : vector<1x16xf32>
    %27 = math.rsqrt %26 : vector<1x16xf32>
    %28 = vector.broadcast %27 : vector<1x16xf32> to vector<32x16xf32>
    %29 = arith.mulf %24, %28 : vector<32x16xf32>
    %c0_13 = arith.constant 0 : index
    %c0_14 = arith.constant 0 : index
    %30 = vector.load %arg4[%c0_13, %c0_14] : memref<32x1xf32, #tpu.memory_space<vmem>>, vector<32x1xf32>
    %31 = vector.broadcast %30 : vector<32x1xf32> to vector<32x16xf32>
    %32 = arith.mulf %29, %31 : vector<32x16xf32>
    %c0_15 = arith.constant 0 : index
    %c0_16 = arith.constant 0 : index
    %33 = vector.load %arg5[%c0_15, %c0_16] : memref<32x1xf32, #tpu.memory_space<vmem>>, vector<32x1xf32>
    %34 = vector.broadcast %33 : vector<32x1xf32> to vector<32x16xf32>
    %35 = arith.addf %32, %34 : vector<32x16xf32>
    %36 = arith.truncf %35 : vector<32x16xf32> to vector<32x16xbf16>
    %37 = vector.shape_cast %36 : vector<32x16xbf16> to vector<32x1x16xbf16>
    %c1 = arith.constant 1 : index
    %c0_17 = arith.constant 0 : index
    %c0_18 = arith.constant 0 : index
    %38 = vector.load %arg1[%c1, %c0_17, %c0_18] : memref<2x16x16xf32, #tpu.memory_space<vmem>>, vector<1x16x16xf32>
    %39 = vector.shape_cast %38 : vector<1x16x16xf32> to vector<16x16xf32>
    %40 = arith.truncf %39 : vector<16x16xf32> to vector<16x16xbf16>
    %c0_19 = arith.constant 0 : index
    %c0_20 = arith.constant 0 : index
    %41 = vector.load %arg2[%c0_19, %c0_20] : memref<32x16xbf16, #tpu.memory_space<vmem>>, vector<32x16xbf16>
    %cst_21 = arith.constant dense<0.000000e+00> : vector<32x16xf32>
    %42 = tpu.matmul %41, %40, %cst_21 {dimension_numbers = #tpu.dot_dimension_numbers<[1], [0], [0], [1], [0, 0, 1, 1], [], []>} : vector<32x16xbf16>, vector<16x16xbf16>, vector<32x16xf32> -> vector<32x16xf32>
    %c0_22 = arith.constant 0 : index
    %c0_23 = arith.constant 0 : index
    %43 = vector.load %arg3[%c0_22, %c0_23] : memref<32x1xf32, #tpu.memory_space<vmem>>, vector<32x1xf32>
    %44 = vector.broadcast %43 : vector<32x1xf32> to vector<32x16xf32>
    %45 = arith.addf %42, %44 : vector<32x16xf32>
    %cst_24 = arith.constant 0.000000e+00 : f32
    %46 = vector.broadcast %cst_24 : f32 to vector<32x16xf32>
    %47 = arith.maximumf %45, %46 : vector<32x16xf32>
    %cst_25 = arith.constant dense<0.000000e+00> : vector<16xf32>
    %48 = vector.multi_reduction <add>, %47, %cst_25 [0] : vector<32x16xf32> to vector<16xf32>
    %49 = vector.shape_cast %48 : vector<16xf32> to vector<1x16xf32>
    %cst_26 = arith.constant 3.125000e-02 : f32
    %50 = vector.broadcast %cst_26 : f32 to vector<1x16xf32>
    %51 = arith.mulf %49, %50 : vector<1x16xf32>
    %52 = arith.mulf %47, %47 : vector<32x16xf32>
    %cst_27 = arith.constant dense<0.000000e+00> : vector<16xf32>
    %53 = vector.multi_reduction <add>, %52, %cst_27 [0] : vector<32x16xf32> to vector<16xf32>
    %54 = vector.shape_cast %53 : vector<16xf32> to vector<1x16xf32>
    %cst_28 = arith.constant 3.125000e-02 : f32
    %55 = vector.broadcast %cst_28 : f32 to vector<1x16xf32>
    %56 = arith.mulf %54, %55 : vector<1x16xf32>
    %57 = arith.mulf %51, %51 : vector<1x16xf32>
    %58 = arith.subf %56, %57 : vector<1x16xf32>
    %cst_29 = arith.constant 0.000000e+00 : f32
    %59 = vector.broadcast %cst_29 : f32 to vector<1x16xf32>
    %60 = arith.maximumf %58, %59 : vector<1x16xf32>
    %61 = vector.broadcast %51 : vector<1x16xf32> to vector<32x16xf32>
    %62 = arith.subf %47, %61 : vector<32x16xf32>
    %cst_30 = arith.constant 9.99999974E-6 : f32
    %63 = vector.broadcast %cst_30 : f32 to vector<1x16xf32>
    %64 = arith.addf %60, %63 : vector<1x16xf32>
    %65 = math.rsqrt %64 : vector<1x16xf32>
    %66 = vector.broadcast %65 : vector<1x16xf32> to vector<32x16xf32>
    %67 = arith.mulf %62, %66 : vector<32x16xf32>
    %c0_31 = arith.constant 0 : index
    %c0_32 = arith.constant 0 : index
    %68 = vector.load %arg4[%c0_31, %c0_32] : memref<32x1xf32, #tpu.memory_space<vmem>>, vector<32x1xf32>
    %69 = vector.broadcast %68 : vector<32x1xf32> to vector<32x16xf32>
    %70 = arith.mulf %67, %69 : vector<32x16xf32>
    %c0_33 = arith.constant 0 : index
    %c0_34 = arith.constant 0 : index
    %71 = vector.load %arg5[%c0_33, %c0_34] : memref<32x1xf32, #tpu.memory_space<vmem>>, vector<32x1xf32>
    %72 = vector.broadcast %71 : vector<32x1xf32> to vector<32x16xf32>
    %73 = arith.addf %70, %72 : vector<32x16xf32>
    %74 = arith.truncf %73 : vector<32x16xf32> to vector<32x16xbf16>
    %75 = vector.shape_cast %74 : vector<32x16xbf16> to vector<32x1x16xbf16>
    %76 = tpu.concatenate %37, %75 in 1 : vector<32x1x16xbf16>, vector<32x1x16xbf16> -> vector<32x2x16xbf16>
    %c0_35 = arith.constant 0 : index
    %c0_36 = arith.constant 0 : index
    %c0_37 = arith.constant 0 : index
    %77 = vector.load %arg6[%c0_35, %c0_36, %c0_37] : memref<32x2x16xbf16, #tpu.memory_space<vmem>>, vector<32x2x16xbf16>
    tpu.vector_store %arg6[%c0_35, %c0_36, %c0_37], %76 {strides = array<i32>} : memref<32x2x16xbf16, #tpu.memory_space<vmem>>, vector<32x2x16xbf16>,
    return
  }
  func.func @transform_0(%arg0: i32) -> (i32, i32, i32) {
    %c0_i32 = arith.constant 0 : i32
    %c0_i32_0 = arith.constant 0 : i32
    %c0_i32_1 = arith.constant 0 : i32
    return %c0_i32, %c0_i32_0, %arg0 : i32, i32, i32
  }
  func.func @transform_1(%arg0: i32) -> (i32, i32) {
    %c0_i32 = arith.constant 0 : i32
    %c0_i32_0 = arith.constant 0 : i32
    %c0_i32_1 = arith.constant 0 : i32
    return %c0_i32, %c0_i32_0 : i32, i32
  }
  func.func @transform_2(%arg0: i32) -> (i32, i32) {
    %c0_i32 = arith.constant 0 : i32
    %c0_i32_0 = arith.constant 0 : i32
    %c0_i32_1 = arith.constant 0 : i32
    return %c0_i32, %c0_i32_0 : i32, i32
  }
  func.func @transform_3(%arg0: i32) -> (i32, i32) {
    %c0_i32 = arith.constant 0 : i32
    %c0_i32_0 = arith.constant 0 : i32
    %c0_i32_1 = arith.constant 0 : i32
    return %c0_i32, %c0_i32_0 : i32, i32
  }
  func.func @transform_4(%arg0: i32) -> (i32, i32) {
    %c0_i32 = arith.constant 0 : i32
    %c0_i32_0 = arith.constant 0 : i32
    %c0_i32_1 = arith.constant 0 : i32
    return %c0_i32, %c0_i32_0 : i32, i32
  }
  func.func @transform_5(%arg0: i32) -> (i32, i32, i32) {
    %c0_i32 = arith.constant 0 : i32
    %c0_i32_0 = arith.constant 0 : i32
    %c0_i32_1 = arith.constant 0 : i32
    return %c0_i32, %c0_i32_0, %arg0 : i32, i32, i32
  }
}

</mosaic_0001>

<llo_original>
// kernel: tpu_custom_call.1
$region0: #{tpu_custom_call.1}
  #allocation0 [shape = 'u32[]', space=smem, size = 0x4, offset = 0x4, fixed_abs, tag = 'smem constant byte address 0x4 - core index']
  #allocation1 [shape = 'u32[72,128]{1,0:T(1,128)}', space=vmem, size = 0x9000, scoped, tag = 'internal scratch']
  %s0 = inlined_call_operand.vmem [shape: f32[2,16,16], index: 0, kind: input, shape index: {}]
  %s1 = inlined_call_operand.vmem [shape: bf16[32,16], index: 1, kind: input, shape index: {}]
  %s2 = inlined_call_operand.vmem [shape: f32[32,1], index: 2, kind: input, shape index: {}]
  %s3 = inlined_call_operand.vmem [shape: f32[32,1], index: 3, kind: input, shape index: {}]
  %s4 = inlined_call_operand.vmem [shape: f32[32,1], index: 4, kind: input, shape index: {}]
  %s5 = inlined_call_operand.vmem [shape: bf16[32,2,16], index: 5, kind: output, shape index: {}]
  %s6 = sld [smem:[#allocation0]]
  $region30: #{tpu_custom_call.1} parent=0
    _
  %s8 = ssub.s32 1, %s6
  %s9 = scalar_select 0, %s8, %s6
  // Predicated region
  $region2: #{tpu_custom_call.1} parent=0 // pred_check
    _
  $region3: #{tpu_custom_call.1} parent=0 // pred_check_branch
    %11 = sbr.rel (0) target = $region5
  $region4: #{tpu_custom_call.1} parent=0 // pred_region
    _
  $region5: #{tpu_custom_call.1} parent=0 // pred_fallthru
    _
  // Predicated region
  $region6: #{tpu_custom_call.1} parent=0 // pred_check
    _
  $region7: #{tpu_custom_call.1} parent=0 // pred_check_branch
    %13 = sbr.rel (0) target = $region9
  $region8: #{tpu_custom_call.1} parent=0 // pred_region
    _
  $region9: #{tpu_custom_call.1} parent=0 // pred_fallthru
    _
  // Predicated region
  $region10: #{tpu_custom_call.1} parent=0 // pred_check
    _
  $region11: #{tpu_custom_call.1} parent=0 // pred_check_branch
    %15 = sbr.rel (0) target = $region13
  $region12: #{tpu_custom_call.1} parent=0 // pred_region
    _
  $region13: #{tpu_custom_call.1} parent=0 // pred_fallthru
    _
  // Predicated region
  $region14: #{tpu_custom_call.1} parent=0 // pred_check
    _
  $region15: #{tpu_custom_call.1} parent=0 // pred_check_branch
    %17 = sbr.rel (0) target = $region17
  $region16: #{tpu_custom_call.1} parent=0 // pred_region
    _
  $region17: #{tpu_custom_call.1} parent=0 // pred_fallthru
    _
  // Predicated region
  $region18: #{tpu_custom_call.1} parent=0 // pred_check
    _
  $region19: #{tpu_custom_call.1} parent=0 // pred_check_branch
    %19 = sbr.rel (0) target = $region21
  $region20: #{tpu_custom_call.1} parent=0 // pred_region
    _
  $region21: #{tpu_custom_call.1} parent=0 // pred_fallthru
    _
  %v21 = vld [vmem:[%s0] sm:$0xff]
  %v22 = vld [vmem:[%s0 + $0x8] sm:$0xff]
  %v23 = vpack.c.bf16 %v22, %v21
  %v24 = vld [vmem:[%s1] sm:$0xf]
  %v25 = vld [vmem:[%s1 + $0x4] sm:$0xf]
  %v26 = vld [vmem:[%s1 + $0x8] sm:$0xf]
  %v27 = vld [vmem:[%s1 + $0xc] sm:$0xf]
  %v28 = vld [vmem:[%s2] sm:$0xff]
  %v29 = vld [vmem:[%s2 + $0x8] sm:$0xff]
  %v30 = vld [vmem:[%s2 + $0x10] sm:$0xff]
  %v31 = vld [vmem:[%s2 + $0x18] sm:$0xff]
  %33 = vset.pattern.permute.xlu0 0
  %34 = vperm.xlu0 %33, %v28
  %v35 = vpop.permute.xlu0 %34
  %38 = vset.pattern.permute.xlu0 0
  %39 = vperm.xlu0 %38, %v29
  %v40 = vpop.permute.xlu0 %39
  %43 = vset.pattern.permute.xlu0 0
  %44 = vperm.xlu0 %43, %v30
  %v45 = vpop.permute.xlu0 %44
  %48 = vset.pattern.permute.xlu0 0
  %49 = vperm.xlu0 %48, %v31
  %v50 = vpop.permute.xlu0 %49
  %v56 = vunpack.c.l.b16 %v24
  %v57 = vunpack.c.l.b16 %v25
  %v58 = vunpack.c.l.b16 %v26
  %v59 = vunpack.c.l.b16 %v27
  %v60 = vpack.c.b16 %v57, %v56
  %v61 = vpack.c.b16 %v59, %v58
  %vm62 = vcmask 130048
  %v64 = vsel %vm62, %v60, 0
  %v67 = vsel %vm62, %v61, 0
  %69 = vmatpush.bf16.msra.mxu0 0
  %70 = vmatpush.bf16.msra.mxu0 0
  %71 = vmatpush.bf16.msra.mxu0 0
  %72 = vmatpush.bf16.msra.mxu0 0
  %73 = vmatpush.bf16.msra.mxu0 0
  %74 = vmatpush.bf16.msra.mxu0 0
  %75 = vmatpush.bf16.msra.mxu0 0
  %76 = vmatpush.bf16.msra.mxu0 %v23
  %77 = vmatmul.bf16.gmra.mxu0 %v64
  %v78 = vpop.f32.mrf.mxu0
  %v79 = vadd.f32 %v35, %v78
  %v80 = vpop.f32.mrf.mxu0
  %v81 = vadd.f32 %v40, %v80
  %82 = vmatmul.bf16.gmra.mxu0 %v67
  %v83 = vpop.f32.mrf.mxu0
  %v84 = vadd.f32 %v45, %v83
  %v85 = vpop.f32.mrf.mxu0
  %v86 = vadd.f32 %v50, %v85
  %87 = vdwg.mxu0
  %v88 = vmax.f32 %v79, 0.0
  %v89 = vmax.f32 %v81, 0.0
  %v90 = vmax.f32 %v84, 0.0
  %v91 = vmax.f32 %v86, 0.0
  %v92 = vsel %vm62, %v88, 0.0
  %v93 = vsel %vm62, %v89, 0.0
  %v94 = vadd.f32 %v92, %v93
  %v95 = vsel %vm62, %v90, 0.0
  %v96 = vadd.f32 %v94, %v95
  %v97 = vsel %vm62, %v91, 0.0
  %v98 = vadd.f32 %v96, %v97
  %v99 = vrot.slane %v98, 4
  %v100 = vadd.f32 %v98, %v99
  %v101 = vrot.slane %v100, 2
  %v102 = vadd.f32 %v100, %v101
  %v103 = vrot.slane %v102, 1
  %v104 = vadd.f32 %v102, %v103
  %v105 = vmul.f32 %v104, 0.03125
  %v106 = vmul.f32 %v88, %v88
  %v107 = vmul.f32 %v89, %v89
  %v108 = vmul.f32 %v90, %v90
  %v109 = vmul.f32 %v91, %v91
  %v110 = vsel %vm62, %v106, 0.0
  %v111 = vsel %vm62, %v107, 0.0
  %v112 = vadd.f32 %v110, %v111
  %v113 = vsel %vm62, %v108, 0.0
  %v114 = vadd.f32 %v112, %v113
  %v115 = vsel %vm62, %v109, 0.0
  %v116 = vadd.f32 %v114, %v115
  %v117 = vrot.slane %v116, 4
  %v118 = vadd.f32 %v116, %v117
  %v119 = vrot.slane %v118, 2
  %v120 = vadd.f32 %v118, %v119
  %v121 = vrot.slane %v120, 1
  %v122 = vadd.f32 %v120, %v121
  %v123 = vmul.f32 %v122, 0.03125
  %v124 = vmul.f32 %v105, %v105
  %v125 = vsub.f32 %v123, %v124
  %v126 = vmax.f32 %v125, 0.0
  %v127 = vsub.f32 %v88, %v105
  %v128 = vsub.f32 %v89, %v105
  %v129 = vsub.f32 %v90, %v105
  %v130 = vsub.f32 %v91, %v105
  %v131 = vadd.f32 %v126, 1e-05
  %v132 = vrsqrt.pop %v131
  %v133 = vmul.f32 %v132, %v131
  %v134 = vmul.f32 %v133, %v132
  %v135 = vmul.f32 0.5, %v134
  %v136 = vsub.f32 1.5, %v135
  %v137 = vmul.f32 %v132, %v136
  %vm138 = vweird.f32 %v131
  %vm139 = vweird.f32 %v132
  %vm140 = vmor %vm138, %vm139
  %v141 = vsel %vm140, %v132, %v137
  %v142 = vmul.f32 %v127, %v141
  %v143 = vmul.f32 %v128, %v141
  %v144 = vmul.f32 %v129, %v141
  %v145 = vmul.f32 %v130, %v141
  %v146 = vld [vmem:[%s3] sm:$0xff]
  %v147 = vld [vmem:[%s3 + $0x8] sm:$0xff]
  %v148 = vld [vmem:[%s3 + $0x10] sm:$0xff]
  %v149 = vld [vmem:[%s3 + $0x18] sm:$0xff]
  %151 = vset.pattern.permute.xlu0 0
  %152 = vperm.xlu0 %151, %v146
  %v153 = vpop.permute.xlu0 %152
  %156 = vset.pattern.permute.xlu0 0
  %157 = vperm.xlu0 %156, %v147
  %v158 = vpop.permute.xlu0 %157
  %161 = vset.pattern.permute.xlu0 0
  %162 = vperm.xlu0 %161, %v148
  %v163 = vpop.permute.xlu0 %162
  %166 = vset.pattern.permute.xlu0 0
  %167 = vperm.xlu0 %166, %v149
  %v168 = vpop.permute.xlu0 %167
  %v170 = vmul.f32 %v142, %v153
  %v171 = vmul.f32 %v143, %v158
  %v172 = vmul.f32 %v144, %v163
  %v173 = vmul.f32 %v145, %v168
  %v174 = vld [vmem:[%s4] sm:$0xff]
  %v175 = vld [vmem:[%s4 + $0x8] sm:$0xff]
  %v176 = vld [vmem:[%s4 + $0x10] sm:$0xff]
  %v177 = vld [vmem:[%s4 + $0x18] sm:$0xff]
  %179 = vset.pattern.permute.xlu0 0
  %180 = vperm.xlu0 %179, %v174
  %v181 = vpop.permute.xlu0 %180
  %184 = vset.pattern.permute.xlu0 0
  %185 = vperm.xlu0 %184, %v175
  %v186 = vpop.permute.xlu0 %185
  %189 = vset.pattern.permute.xlu0 0
  %190 = vperm.xlu0 %189, %v176
  %v191 = vpop.permute.xlu0 %190
  %194 = vset.pattern.permute.xlu0 0
  %195 = vperm.xlu0 %194, %v177
  %v196 = vpop.permute.xlu0 %195
  %v198 = vadd.f32 %v170, %v181
  %v199 = vadd.f32 %v171, %v186
  %v200 = vadd.f32 %v172, %v191
  %v201 = vadd.f32 %v173, %v196
  %v202 = vpack.c.bf16 %v198, %v198
  %v203 = vpack.c.bf16 %v199, %v199
  %v204 = vpack.c.bf16 %v200, %v200
  %v205 = vpack.c.bf16 %v201, %v201
  %v210 = vrot.slane %v202, 3
  %v211 = vrot.slane %v203, 3
  %v212 = vrot.slane %v204, 3
  %v213 = vrot.slane %v205, 3
  %vm214 = vcmask 1040384
  %v217 = vsel %vm214, %v202, %v210
  %vm219 = vcmask 1041409
  %v220 = vsel %vm219, %v202, %v210
  %v222 = vrot.slane %v220, 1
  %vm223 = vcmask 1042434
  %v224 = vsel %vm223, %v202, %v210
  %v226 = vrot.slane %v224, 2
  %vm227 = vcmask 1043459
  %v228 = vsel %vm227, %v202, %v210
  %v230 = vrot.slane %v228, 3
  %v233 = vsel %vm214, %v203, %v211
  %v235 = vsel %vm219, %v203, %v211
  %v237 = vrot.slane %v235, 1
  %v238 = vsel %vm223, %v203, %v211
  %v240 = vrot.slane %v238, 2
  %v241 = vsel %vm227, %v203, %v211
  %v243 = vrot.slane %v241, 3
  %v246 = vsel %vm214, %v204, %v212
  %v248 = vsel %vm219, %v204, %v212
  %v250 = vrot.slane %v248, 1
  %v251 = vsel %vm223, %v204, %v212
  %v253 = vrot.slane %v251, 2
  %v254 = vsel %vm227, %v204, %v212
  %v256 = vrot.slane %v254, 3
  %v259 = vsel %vm214, %v205, %v213
  %v261 = vsel %vm219, %v205, %v213
  %v263 = vrot.slane %v261, 1
  %v264 = vsel %vm223, %v205, %v213
  %v266 = vrot.slane %v264, 2
  %v267 = vsel %vm227, %v205, %v213
  %v269 = vrot.slane %v267, 3
  %v270 = vunpack.i.l.s16 %v217
  %v271 = vunpack.i.h.s16 %v217
  %v272 = vunpack.i.l.s16 %v222
  %v273 = vunpack.i.h.s16 %v222
  %v274 = vunpack.i.l.s16 %v226
  %v275 = vunpack.i.h.s16 %v226
  %v276 = vunpack.i.l.s16 %v230
  %v277 = vunpack.i.h.s16 %v230
  %v278 = vunpack.i.l.s16 %v233
  %v279 = vunpack.i.h.s16 %v233
  %v280 = vunpack.i.l.s16 %v237
  %v281 = vunpack.i.h.s16 %v237
  %v282 = vunpack.i.l.s16 %v240
  %v283 = vunpack.i.h.s16 %v240
  %v284 = vunpack.i.l.s16 %v243
  %v285 = vunpack.i.h.s16 %v243
  %v286 = vunpack.i.l.s16 %v246
  %v287 = vunpack.i.h.s16 %v246
  %v288 = vunpack.i.l.s16 %v250
  %v289 = vunpack.i.h.s16 %v250
  %v290 = vunpack.i.l.s16 %v253
  %v291 = vunpack.i.h.s16 %v253
  %v292 = vunpack.i.l.s16 %v256
  %v293 = vunpack.i.h.s16 %v256
  %v294 = vunpack.i.l.s16 %v259
  %v295 = vunpack.i.h.s16 %v259
  %v296 = vunpack.i.l.s16 %v263
  %v297 = vunpack.i.h.s16 %v263
  %v298 = vunpack.i.l.s16 %v266
  %v299 = vunpack.i.h.s16 %v266
  %v300 = vunpack.i.l.s16 %v269
  %v301 = vunpack.i.h.s16 %v269
  %s302 = scalar_lea.vmem %s0, 16
  %v303 = vld [vmem:[%s302] sm:$0xff]
  %v304 = vld [vmem:[%s302 + $0x8] sm:$0xff]
  %v305 = vpack.c.bf16 %v304, %v303
  %306 = vmatpush.bf16.msra.mxu0 0
  %307 = vmatpush.bf16.msra.mxu0 0
  %308 = vmatpush.bf16.msra.mxu0 0
  %309 = vmatpush.bf16.msra.mxu0 0
  %310 = vmatpush.bf16.msra.mxu0 0
  %311 = vmatpush.bf16.msra.mxu0 0
  %312 = vmatpush.bf16.msra.mxu0 0
  %313 = vmatpush.bf16.msra.mxu0 %v305
  %314 = vmatmul.bf16.gmra.mxu0 %v64
  %v315 = vpop.f32.mrf.mxu0
  %v316 = vadd.f32 %v35, %v315
  %v317 = vpop.f32.mrf.mxu0
  %v318 = vadd.f32 %v40, %v317
  %319 = vmatmul.bf16.gmra.mxu0 %v67
  %v320 = vpop.f32.mrf.mxu0
  %v321 = vadd.f32 %v45, %v320
  %v322 = vpop.f32.mrf.mxu0
  %v323 = vadd.f32 %v50, %v322
  %324 = vdwg.mxu0
  %v325 = vmax.f32 %v316, 0.0
  %v326 = vmax.f32 %v318, 0.0
  %v327 = vmax.f32 %v321, 0.0
  %v328 = vmax.f32 %v323, 0.0
  %v329 = vsel %vm62, %v325, 0.0
  %v330 = vsel %vm62, %v326, 0.0
  %v331 = vadd.f32 %v329, %v330
  %v332 = vsel %vm62, %v327, 0.0
  %v333 = vadd.f32 %v331, %v332
  %v334 = vsel %vm62, %v328, 0.0
  %v335 = vadd.f32 %v333, %v334
  %v336 = vrot.slane %v335, 4
  %v337 = vadd.f32 %v335, %v336
  %v338 = vrot.slane %v337, 2
  %v339 = vadd.f32 %v337, %v338
  %v340 = vrot.slane %v339, 1
  %v341 = vadd.f32 %v339, %v340
  %v342 = vmul.f32 %v341, 0.03125
  %v343 = vmul.f32 %v325, %v325
  %v344 = vmul.f32 %v326, %v326
  %v345 = vmul.f32 %v327, %v327
  %v346 = vmul.f32 %v328, %v328
  %v347 = vsel %vm62, %v343, 0.0
  %v348 = vsel %vm62, %v344, 0.0
  %v349 = vadd.f32 %v347, %v348
  %v350 = vsel %vm62, %v345, 0.0
  %v351 = vadd.f32 %v349, %v350
  %v352 = vsel %vm62, %v346, 0.0
  %v353 = vadd.f32 %v351, %v352
  %v354 = vrot.slane %v353, 4
  %v355 = vadd.f32 %v353, %v354
  %v356 = vrot.slane %v355, 2
  %v357 = vadd.f32 %v355, %v356
  %v358 = vrot.slane %v357, 1
  %v359 = vadd.f32 %v357, %v358
  %v360 = vmul.f32 %v359, 0.03125
  %v361 = vmul.f32 %v342, %v342
  %v362 = vsub.f32 %v360, %v361
  %v363 = vmax.f32 %v362, 0.0
  %v364 = vsub.f32 %v325, %v342
  %v365 = vsub.f32 %v326, %v342
  %v366 = vsub.f32 %v327, %v342
  %v367 = vsub.f32 %v328, %v342
  %v368 = vadd.f32 %v363, 1e-05
  %v369 = vrsqrt.pop %v368
  %v370 = vmul.f32 %v369, %v368
  %v371 = vmul.f32 %v370, %v369
  %v372 = vmul.f32 0.5, %v371
  %v373 = vsub.f32 1.5, %v372
  %v374 = vmul.f32 %v369, %v373
  %vm375 = vweird.f32 %v368
  %vm376 = vweird.f32 %v369
  %vm377 = vmor %vm375, %vm376
  %v378 = vsel %vm377, %v369, %v374
  %v379 = vmul.f32 %v364, %v378
  %v380 = vmul.f32 %v365, %v378
  %v381 = vmul.f32 %v366, %v378
  %v382 = vmul.f32 %v367, %v378
  %v383 = vmul.f32 %v379, %v153
  %v384 = vmul.f32 %v380, %v158
  %v385 = vmul.f32 %v381, %v163
  %v386 = vmul.f32 %v382, %v168
  %v387 = vadd.f32 %v383, %v181
  %v388 = vadd.f32 %v384, %v186
  %v389 = vadd.f32 %v385, %v191
  %v390 = vadd.f32 %v386, %v196
  %v391 = vpack.c.bf16 %v387, %v387
  %v392 = vpack.c.bf16 %v388, %v388
  %v393 = vpack.c.bf16 %v389, %v389
  %v394 = vpack.c.bf16 %v390, %v390
  %v399 = vrot.slane %v391, 3
  %v400 = vrot.slane %v392, 3
  %v401 = vrot.slane %v393, 3
  %v402 = vrot.slane %v394, 3
  %v405 = vsel %vm214, %v391, %v399
  %v407 = vsel %vm219, %v391, %v399
  %v409 = vrot.slane %v407, 1
  %v410 = vsel %vm223, %v391, %v399
  %v412 = vrot.slane %v410, 2
  %v413 = vsel %vm227, %v391, %v399
  %v415 = vrot.slane %v413, 3
  %v418 = vsel %vm214, %v392, %v400
  %v420 = vsel %vm219, %v392, %v400
  %v422 = vrot.slane %v420, 1
  %v423 = vsel %vm223, %v392, %v400
  %v425 = vrot.slane %v423, 2
  %v426 = vsel %vm227, %v392, %v400
  %v428 = vrot.slane %v426, 3
  %v431 = vsel %vm214, %v393, %v401
  %v433 = vsel %vm219, %v393, %v401
  %v435 = vrot.slane %v433, 1
  %v436 = vsel %vm223, %v393, %v401
  %v438 = vrot.slane %v436, 2
  %v439 = vsel %vm227, %v393, %v401
  %v441 = vrot.slane %v439, 3
  %v444 = vsel %vm214, %v394, %v402
  %v446 = vsel %vm219, %v394, %v402
  %v448 = vrot.slane %v446, 1
  %v449 = vsel %vm223, %v394, %v402
  %v451 = vrot.slane %v449, 2
  %v452 = vsel %vm227, %v394, %v402
  %v454 = vrot.slane %v452, 3
  %v455 = vunpack.i.l.s16 %v405
  %v456 = vunpack.i.h.s16 %v405
  %v457 = vunpack.i.l.s16 %v409
  %v458 = vunpack.i.h.s16 %v409
  %v459 = vunpack.i.l.s16 %v412
  %v460 = vunpack.i.h.s16 %v412
  %v461 = vunpack.i.l.s16 %v415
  %v462 = vunpack.i.h.s16 %v415
  %v463 = vunpack.i.l.s16 %v418
  %v464 = vunpack.i.h.s16 %v418
  %v465 = vunpack.i.l.s16 %v422
  %v466 = vunpack.i.h.s16 %v422
  %v467 = vunpack.i.l.s16 %v425
  %v468 = vunpack.i.h.s16 %v425
  %v469 = vunpack.i.l.s16 %v428
  %v470 = vunpack.i.h.s16 %v428
  %v471 = vunpack.i.l.s16 %v431
  %v472 = vunpack.i.h.s16 %v431
  %v473 = vunpack.i.l.s16 %v435
  %v474 = vunpack.i.h.s16 %v435
  %v475 = vunpack.i.l.s16 %v438
  %v476 = vunpack.i.h.s16 %v438
  %v477 = vunpack.i.l.s16 %v441
  %v478 = vunpack.i.h.s16 %v441
  %v479 = vunpack.i.l.s16 %v444
  %v480 = vunpack.i.h.s16 %v444
  %v481 = vunpack.i.l.s16 %v448
  %v482 = vunpack.i.h.s16 %v448
  %v483 = vunpack.i.l.s16 %v451
  %v484 = vunpack.i.h.s16 %v451
  %v485 = vunpack.i.l.s16 %v454
  %v486 = vunpack.i.h.s16 %v454
  %v487 = vpack.i.b16 %v270, %v270
  %v488 = vpack.i.b16 %v271, %v271
  %v489 = vpack.i.b16 %v272, %v272
  %v490 = vpack.i.b16 %v273, %v273
  %v491 = vpack.i.b16 %v274, %v274
  %v492 = vpack.i.b16 %v275, %v275
  %v493 = vpack.i.b16 %v276, %v276
  %v494 = vpack.i.b16 %v277, %v277
  %v495 = vpack.i.b16 %v278, %v278
  %v496 = vpack.i.b16 %v279, %v279
  %v497 = vpack.i.b16 %v280, %v280
  %v498 = vpack.i.b16 %v281, %v281
  %v499 = vpack.i.b16 %v282, %v282
  %v500 = vpack.i.b16 %v283, %v283
  %v501 = vpack.i.b16 %v284, %v284
  %v502 = vpack.i.b16 %v285, %v285
  %v503 = vpack.i.b16 %v286, %v286
  %v504 = vpack.i.b16 %v287, %v287
  %v505 = vpack.i.b16 %v288, %v288
  %v506 = vpack.i.b16 %v289, %v289
  %v507 = vpack.i.b16 %v290, %v290
  %v508 = vpack.i.b16 %v291, %v291
  %v509 = vpack.i.b16 %v292, %v292
  %v510 = vpack.i.b16 %v293, %v293
  %v511 = vpack.i.b16 %v294, %v294
  %v512 = vpack.i.b16 %v295, %v295
  %v513 = vpack.i.b16 %v296, %v296
  %v514 = vpack.i.b16 %v297, %v297
  %v515 = vpack.i.b16 %v298, %v298
  %v516 = vpack.i.b16 %v299, %v299
  %v517 = vpack.i.b16 %v300, %v300
  %v518 = vpack.i.b16 %v301, %v301
  %v519 = vperm.slane %v487, 0
  %v520 = vperm.slane %v488, 0
  %v521 = vperm.slane %v489, 0
  %v522 = vperm.slane %v490, 0
  %v523 = vperm.slane %v491, 0
  %v524 = vperm.slane %v492, 0
  %v525 = vperm.slane %v493, 0
  %v526 = vperm.slane %v494, 0
  %v527 = vperm.slane %v495, 0
  %v528 = vperm.slane %v496, 0
  %v529 = vperm.slane %v497, 0
  %v530 = vperm.slane %v498, 0
  %v531 = vperm.slane %v499, 0
  %v532 = vperm.slane %v500, 0
  %v533 = vperm.slane %v501, 0
  %v534 = vperm.slane %v502, 0
  %v535 = vperm.slane %v503, 0
  %v536 = vperm.slane %v504, 0
  %v537 = vperm.slane %v505, 0
  %v538 = vperm.slane %v506, 0
  %v539 = vperm.slane %v507, 0
  %v540 = vperm.slane %v508, 0
  %v541 = vperm.slane %v509, 0
  %v542 = vperm.slane %v510, 0
  %v543 = vperm.slane %v511, 0
  %v544 = vperm.slane %v512, 0
  %v545 = vperm.slane %v513, 0
  %v546 = vperm.slane %v514, 0
  %v547 = vperm.slane %v515, 0
  %v548 = vperm.slane %v516, 0
  %v549 = vperm.slane %v517, 0
  %v550 = vperm.slane %v518, 0
  %v583 = vpack.i.b16 %v455, %v455
  %v584 = vpack.i.b16 %v456, %v456
  %v585 = vpack.i.b16 %v457, %v457
  %v586 = vpack.i.b16 %v458, %v458
  %v587 = vpack.i.b16 %v459, %v459
  %v588 = vpack.i.b16 %v460, %v460
  %v589 = vpack.i.b16 %v461, %v461
  %v590 = vpack.i.b16 %v462, %v462
  %v591 = vpack.i.b16 %v463, %v463
  %v592 = vpack.i.b16 %v464, %v464
  %v593 = vpack.i.b16 %v465, %v465
  %v594 = vpack.i.b16 %v466, %v466
  %v595 = vpack.i.b16 %v467, %v467
  %v596 = vpack.i.b16 %v468, %v468
  %v597 = vpack.i.b16 %v469, %v469
  %v598 = vpack.i.b16 %v470, %v470
  %v599 = vpack.i.b16 %v471, %v471
  %v600 = vpack.i.b16 %v472, %v472
  %v601 = vpack.i.b16 %v473, %v473
  %v602 = vpack.i.b16 %v474, %v474
  %v603 = vpack.i.b16 %v475, %v475
  %v604 = vpack.i.b16 %v476, %v476
  %v605 = vpack.i.b16 %v477, %v477
  %v606 = vpack.i.b16 %v478, %v478
  %v607 = vpack.i.b16 %v479, %v479
  %v608 = vpack.i.b16 %v480, %v480
  %v609 = vpack.i.b16 %v481, %v481
  %v610 = vpack.i.b16 %v482, %v482
  %v611 = vpack.i.b16 %v483, %v483
  %v612 = vpack.i.b16 %v484, %v484
  %v613 = vpack.i.b16 %v485, %v485
  %v614 = vpack.i.b16 %v486, %v486
  %v615 = vperm.slane %v583, 0
  %v616 = vperm.slane %v584, 0
  %v617 = vperm.slane %v585, 0
  %v618 = vperm.slane %v586, 0
  %v619 = vperm.slane %v587, 0
  %v620 = vperm.slane %v588, 0
  %v621 = vperm.slane %v589, 0
  %v622 = vperm.slane %v590, 0
  %v623 = vperm.slane %v591, 0
  %v624 = vperm.slane %v592, 0
  %v625 = vperm.slane %v593, 0
  %v626 = vperm.slane %v594, 0
  %v627 = vperm.slane %v595, 0
  %v628 = vperm.slane %v596, 0
  %v629 = vperm.slane %v597, 0
  %v630 = vperm.slane %v598, 0
  %v631 = vperm.slane %v599, 0
  %v632 = vperm.slane %v600, 0
  %v633 = vperm.slane %v601, 0
  %v634 = vperm.slane %v602, 0
  %v635 = vperm.slane %v603, 0
  %v636 = vperm.slane %v604, 0
  %v637 = vperm.slane %v605, 0
  %v638 = vperm.slane %v606, 0
  %v639 = vperm.slane %v607, 0
  %v640 = vperm.slane %v608, 0
  %v641 = vperm.slane %v609, 0
  %v642 = vperm.slane %v610, 0
  %v643 = vperm.slane %v611, 0
  %v644 = vperm.slane %v612, 0
  %v645 = vperm.slane %v613, 0
  %v646 = vperm.slane %v614, 0
  %vm679 = vcmask 1040384
  %vm680 = vsmask.f32 256
  %vm681 = vmand %vm679, %vm680
  %v682 = vsel %vm681, %v519, %v615
  %v683 = vsel %vm681, %v520, %v616
  %v684 = vsel %vm681, %v521, %v617
  %v685 = vsel %vm681, %v522, %v618
  %v686 = vsel %vm681, %v523, %v619
  %v687 = vsel %vm681, %v524, %v620
  %v688 = vsel %vm681, %v525, %v621
  %v689 = vsel %vm681, %v526, %v622
  %v690 = vsel %vm681, %v527, %v623
  %v691 = vsel %vm681, %v528, %v624
  %v692 = vsel %vm681, %v529, %v625
  %v693 = vsel %vm681, %v530, %v626
  %v694 = vsel %vm681, %v531, %v627
  %v695 = vsel %vm681, %v532, %v628
  %v696 = vsel %vm681, %v533, %v629
  %v697 = vsel %vm681, %v534, %v630
  %v698 = vsel %vm681, %v535, %v631
  %v699 = vsel %vm681, %v536, %v632
  %v700 = vsel %vm681, %v537, %v633
  %v701 = vsel %vm681, %v538, %v634
  %v702 = vsel %vm681, %v539, %v635
  %v703 = vsel %vm681, %v540, %v636
  %v704 = vsel %vm681, %v541, %v637
  %v705 = vsel %vm681, %v542, %v638
  %v706 = vsel %vm681, %v543, %v639
  %v707 = vsel %vm681, %v544, %v640
  %v708 = vsel %vm681, %v545, %v641
  %v709 = vsel %vm681, %v546, %v642
  %v710 = vsel %vm681, %v547, %v643
  %v711 = vsel %vm681, %v548, %v644
  %v712 = vsel %vm681, %v549, %v645
  %v713 = vsel %vm681, %v550, %v646
  %vm714 = vcmask 122880
  %715 = vst.msk [vmem:[%s5] sm:$0x1] %vm714, %v682
  %716 = vst.msk [vmem:[%s5 + $0x1] sm:$0x1] %vm714, %v683
  %717 = vst.msk [vmem:[%s5 + $0x2] sm:$0x1] %vm714, %v684
  %718 = vst.msk [vmem:[%s5 + $0x3] sm:$0x1] %vm714, %v685
  %719 = vst.msk [vmem:[%s5 + $0x4] sm:$0x1] %vm714, %v686
  %720 = vst.msk [vmem:[%s5 + $0x5] sm:$0x1] %vm714, %v687
  %721 = vst.msk [vmem:[%s5 + $0x6] sm:$0x1] %vm714, %v688
  %722 = vst.msk [vmem:[%s5 + $0x7] sm:$0x1] %vm714, %v689
  %723 = vst.msk [vmem:[%s5 + $0x8] sm:$0x1] %vm714, %v690
  %724 = vst.msk [vmem:[%s5 + $0x9] sm:$0x1] %vm714, %v691
  %725 = vst.msk [vmem:[%s5 + $0xa] sm:$0x1] %vm714, %v692
  %726 = vst.msk [vmem:[%s5 + $0xb] sm:$0x1] %vm714, %v693
  %727 = vst.msk [vmem:[%s5 + $0xc] sm:$0x1] %vm714, %v694
  %728 = vst.msk [vmem:[%s5 + $0xd] sm:$0x1] %vm714, %v695
  %729 = vst.msk [vmem:[%s5 + $0xe] sm:$0x1] %vm714, %v696
  %730 = vst.msk [vmem:[%s5 + $0xf] sm:$0x1] %vm714, %v697
  %731 = vst.msk [vmem:[%s5 + $0x10] sm:$0x1] %vm714, %v698
  %732 = vst.msk [vmem:[%s5 + $0x11] sm:$0x1] %vm714, %v699
  %733 = vst.msk [vmem:[%s5 + $0x12] sm:$0x1] %vm714, %v700
  %734 = vst.msk [vmem:[%s5 + $0x13] sm:$0x1] %vm714, %v701
  %735 = vst.msk [vmem:[%s5 + $0x14] sm:$0x1] %vm714, %v702
  %736 = vst.msk [vmem:[%s5 + $0x15] sm:$0x1] %vm714, %v703
  %737 = vst.msk [vmem:[%s5 + $0x16] sm:$0x1] %vm714, %v704
  %738 = vst.msk [vmem:[%s5 + $0x17] sm:$0x1] %vm714, %v705
  %739 = vst.msk [vmem:[%s5 + $0x18] sm:$0x1] %vm714, %v706
  %740 = vst.msk [vmem:[%s5 + $0x19] sm:$0x1] %vm714, %v707
  %741 = vst.msk [vmem:[%s5 + $0x1a] sm:$0x1] %vm714, %v708
  %742 = vst.msk [vmem:[%s5 + $0x1b] sm:$0x1] %vm714, %v709
  %743 = vst.msk [vmem:[%s5 + $0x1c] sm:$0x1] %vm714, %v710
  %744 = vst.msk [vmem:[%s5 + $0x1d] sm:$0x1] %vm714, %v711
  %745 = vst.msk [vmem:[%s5 + $0x1e] sm:$0x1] %vm714, %v712
  %746 = vst.msk [vmem:[%s5 + $0x1f] sm:$0x1] %vm714, %v713
  // Predicated region
  $region22: #{tpu_custom_call.1} parent=0 // pred_check
    _
  $region23: #{tpu_custom_call.1} parent=0 // pred_check_branch
    %748 = sbr.rel (0) target = $region25
  $region24: #{tpu_custom_call.1} parent=0 // pred_region
    _
  $region25: #{tpu_custom_call.1} parent=0 // pred_fallthru
    _
  // Predicated region
  $region26: #{tpu_custom_call.1} parent=0 // pred_check
    _
  $region27: #{tpu_custom_call.1} parent=0 // pred_check_branch
    %750 = sbr.rel (0) target = $region29
  $region28: #{tpu_custom_call.1} parent=0 // pred_region
    _
  $region29: #{tpu_custom_call.1} parent=0 // pred_fallthru
    _

</llo_original>
